<compile_context>
chip_gen: v7x
topology: tpu7x:2x2x1
jax: 0.10.0
libtpu: 0.0.40
codegen_flags: <defaults>
</compile_context>

<pallas_src>
import jax
import jax.numpy as jnp
from jax.experimental import pallas as pl
from jax.experimental.pallas import tpu as pltpu


_VMEM = pl.BlockSpec(memory_space=pltpu.MemorySpace.VMEM)


def _round_up(x, m):
    return ((x + m - 1) // m) * m


def _pick_tile(dim, cap=512):
    """Largest power-of-two tile <= cap that divides dim (dim is a multiple of 128)."""
    t = cap
    while t >= 128:
        if dim % t == 0:
            return t
        t //= 2
    return dim


def _elu(x):
    # ELU with alpha=1 (matches nn.ELU default)
    return jnp.where(x > 0, x, jnp.exp(jnp.minimum(x, 0.0)) - 1.0)


# ----------------------------------------------------------------------------
# Kernel 1: tiled pooler    h = elu( elu(x) @ Wp + bp )
#   x: (B_pad, D_pad) f32, Wp: (D_pad, D_pad) bf16 (pre-transposed, padded),
#   bp: (1, D_pad) f32.  Grid = (D_pad//tn, D_pad//tk); K (reduction) is last.
# ----------------------------------------------------------------------------
def _pooler_kernel(x_ref, wp_ref, bp_ref, h_ref, acc_ref):
    k = pl.program_id(1)

    @pl.when(k == 0)
    def _():
        acc_ref[...] = jnp.zeros_like(acc_ref)

    a = _elu(x_ref[...]).astype(jnp.bfloat16)          # bf16 MXU inputs
    acc_ref[...] += jnp.dot(a, wp_ref[...], preferred_element_type=jnp.float32)

    @pl.when(k == pl.num_programs(1) - 1)
    def _():
        h_ref[...] = _elu(acc_ref[...] + bp_ref[...])  # bias + ELU in f32


def pooler_forward(x_pad, wp_bf16, bp_pad):
    Bp, Dp = x_pad.shape
    tn = _pick_tile(Dp)
    tk = _pick_tile(Dp)
    grid = (Dp // tn, Dp // tk)
    return pl.pallas_call(
        _pooler_kernel,
        out_shape=jax.ShapeDtypeStruct((Bp, Dp), jnp.float32),
        grid_spec=pltpu.PrefetchScalarGridSpec(
            num_scalar_prefetch=0,
            grid=grid,
            in_specs=[
                pl.BlockSpec((Bp, tk), lambda n, k: (0, k)),   # activations row-block
                pl.BlockSpec((tk, tn), lambda n, k: (k, n)),   # streamed weight tile
                pl.BlockSpec((1, tn), lambda n, k: (0, n)),    # bias slice
            ],
            out_specs=pl.BlockSpec((Bp, tn), lambda n, k: (0, n)),
            scratch_shapes=[pltpu.VMEM((Bp, tn), jnp.float32)],
        ),
        compiler_params=pltpu.CompilerParams(
            # N axis parallel -> sharded across the 2 TCs on v7x; K arbitrary.
            dimension_semantics=("parallel", "arbitrary"),
            vmem_limit_bytes=32 * 1024 * 1024,   # safe on v5e/v6e (128 MiB) and v7x (64 MiB)
        ),
    )(x_pad, wp_bf16, bp_pad)


# ----------------------------------------------------------------------------
# Kernel 2: fused classifier   slab = h @ [fc.T | fc2.T | 0] + [b | b2 | 0]
#   Single lane-dense (B_pad, 128) output; score3/score2 sliced outside.
#   Operands are small (weight <= ~2 MiB bf16 at real size) -> un-tiled VMEM.
# ----------------------------------------------------------------------------
def _classifier_kernel(h_ref, wc_ref, bc_ref, slab_ref):
    hb = h_ref[...].astype(jnp.bfloat16)
    slab_ref[...] = (jnp.dot(hb, wc_ref[...], preferred_element_type=jnp.float32)
                     + bc_ref[...])


def classifier_forward(h, wcls_bf16, bcls):
    Bp = h.shape[0]
    Cp = wcls_bf16.shape[1]
    return pl.pallas_call(
        _classifier_kernel,
        out_shape=jax.ShapeDtypeStruct((Bp, Cp), jnp.float32),
        in_specs=[_VMEM] * 3,
        out_specs=_VMEM,
    )(h, wcls_bf16, bcls)


# ----------------------------------------------------------------------------
# Kernel 3: training loss (tiny -> un-tiled, single invocation)
#   weighted CE(score3, label) + weighted CE(score2, label2)
#   + 1e-5 * loss_para_space(map) + 1e-5 * loss_output_space(map, s2, s3)
# ----------------------------------------------------------------------------
def _weighted_ce(scores, onehot, cls_w):
    m = jnp.max(scores, axis=1, keepdims=True)
    z = scores - m
    lse = jnp.log(jnp.sum(jnp.exp(z), axis=1, keepdims=True))
    logp = z - lse
    nll = -jnp.sum(onehot * logp, axis=1, keepdims=True)      # (B, 1)
    wi = jnp.sum(onehot * cls_w, axis=1, keepdims=True)       # (B, 1)
    return jnp.sum(wi * nll, keepdims=True) / jnp.sum(wi, keepdims=True)   # (1, 1)


def _loss_kernel(s3_ref, s2_ref, oh3_ref, oh2_ref, cw3_ref, cw2_ref,
                 map_ref, fcw3_ref, fcw2_ref, loss_ref):
    s3 = s3_ref[...]
    s2 = s2_ref[...]
    ce = _weighted_ce(s3, oh3_ref[...], cw3_ref[...]) + \
         _weighted_ce(s2, oh2_ref[...], cw2_ref[...])

    # loss_para_space: 0.5 * || map @ fc2.W - fc.W ||^2
    map2 = jnp.dot(map_ref[...], fcw2_ref[...],
                   preferred_element_type=jnp.float32)                     # (C3, D)
    diff = map2 - fcw3_ref[...]
    lpara = 0.5 * jnp.sum(diff * diff, keepdims=True)                      # (1, 1)

    # loss_output_space: mean(relu(softmax(s3) - s2 @ map.T))
    m3 = jnp.max(s3, axis=1, keepdims=True)
    e3 = jnp.exp(s3 - m3)
    sm3 = e3 / jnp.sum(e3, axis=1, keepdims=True)                          # (B, C3)
    s23 = jax.lax.dot_general(s2, map_ref[...],
                              dimension_numbers=(((1,), (1,)), ((), ())),
                              preferred_element_type=jnp.float32)          # (B, C3)
    lout = jnp.mean(jnp.maximum(sm3 - s23, 0.0), keepdims=True)            # (1, 1)

    loss_ref[...] = ce + 1e-5 * lpara + 1e-5 * lout


def train_loss(s3, s2, oh3, oh2, cw3, cw2, mapmat, fc_w, fc2_w):
    out = pl.pallas_call(
        _loss_kernel,
        out_shape=jax.ShapeDtypeStruct((1, 1), jnp.float32),
        in_specs=[_VMEM] * 9,
        out_specs=_VMEM,
    )(s3, s2, oh3, oh2, cw3, cw2, mapmat, fc_w, fc2_w)
    return out[0, 0]


# ----------------------------------------------------------------------------
# Accuracy bookkeeping: one fused device computation + one host transfer
# ----------------------------------------------------------------------------
@jax.jit
def _accuracy_counts(score, label):
    predict = jnp.argmax(score, axis=1).astype(label.dtype)
    mask = label != 0
    right = jnp.sum(((predict == label) & mask).astype(jnp.int32))
    pre_num = jnp.sum((predict != 0).astype(jnp.int32))
    actual = jnp.sum(mask.astype(jnp.int32))
    return jnp.stack([right, pre_num, actual])


def accuracy(score, label, acc_result):
    if acc_result is None:
        acc_result = {'right': 0, 'pre_num': 0, 'actual_num': 0}
    counts = jax.device_get(_accuracy_counts(score, label))   # single host sync
    acc_result['right'] += int(counts[0])
    acc_result['pre_num'] += int(counts[1])
    acc_result['actual_num'] += int(counts[2])
    return acc_result


@jax.jit
def _doc_scores(score):
    return jnp.max(jax.nn.softmax(score, axis=1), axis=0)


def accuracy_doc(score, label, acc_result):
    # Eval-only; Python set logic kept on host as in the reference.
    if acc_result is None:
        acc_result = {'right': 0, 'pre_num': 0, 'actual_num': 0,
                      'labelset': 0, 'doc_num': 0}
    tscore, lab = jax.device_get((_doc_scores(score), label))  # single host sync
    predict = {i for i, s in enumerate(tscore.tolist()) if s > 0.2} - {0}
    lset = set(lab.tolist()) - {0}
    assert len(lset) != 0
    acc_result['actual_num'] += len(lset)
    acc_result['pre_num'] += len(predict)
    acc_result['right'] += len(lset & predict)
    acc_result['labelset'] += len(predict)
    acc_result['doc_num'] += 1
    return acc_result


# ----------------------------------------------------------------------------
# Forward wrapper (mirrors HierarchyBert.forward after the encoder)
# ----------------------------------------------------------------------------
def hierarchy_bert_forward(params, data, mode, acc_result=None):
    H = params['hidden_size']
    D = 10 * H
    Dp = params['D_pad']
    C3 = params['class_num']
    C2 = params['class_num2']

    last_hidden = data['last_hidden_state']
    B = last_hidden.shape[0]
    Bp = max(8, _round_up(B, 8))

    clses = last_hidden[:, :10, :].reshape(B, D)
    x_pad = jnp.zeros((Bp, Dp), jnp.float32).at[:B, :D].set(clses)

    h = pooler_forward(x_pad, params['wp_t_bf16'], params['bp_pad'])      # (Bp, Dp)
    slab = classifier_forward(h, params['wcls_t_bf16'], params['bcls'])   # (Bp, 128)

    score3 = slab[:B, :C3]
    score2 = slab[:B, C3:C3 + C2]

    if mode == 'train':
        oh3 = jax.nn.one_hot(data['label'], C3, dtype=jnp.float32)
        oh2 = jax.nn.one_hot(data['label2'], C2, dtype=jnp.float32)
        loss = train_loss(score3, score2, oh3, oh2,
                          params['class_w'].reshape(1, -1),
                          params['class_w2'].reshape(1, -1),
                          data['map'], params['fc_w'], params['fc2_w'])
        acc_result = accuracy(score3, data['label'], acc_result)
        return {'loss': loss, 'acc_result': acc_result, 'score3': score3}
    else:
        acc_result = accuracy_doc(score3, data['label'], acc_result)
        return {'loss': 0, 'acc_result': acc_result, 'score3': score3}


# ----------------------------------------------------------------------------
# Parameter init (synthetic, matches module __init__ shapes) + one-time prep
# ----------------------------------------------------------------------------
def init_params(key, hidden=32, class_num=8, class_num2=4):
    D = 10 * hidden
    ks = jax.random.split(key, 4)
    scale = 0.05
    return {
        'hidden_size': hidden,
        'class_num': class_num,
        'class_num2': class_num2,
        'pooler_w': scale * jax.random.normal(ks[0], (D, D), jnp.float32),
        'pooler_b': scale * jax.random.normal(ks[1], (D,), jnp.float32),
        'fc_w': scale * jax.random.normal(ks[2], (class_num, D), jnp.float32),
        'fc_b': jnp.zeros((class_num,), jnp.float32),
        'fc2_w': scale * jax.random.normal(ks[3], (class_num2, D), jnp.float32),
        'fc2_b': jnp.zeros((class_num2,), jnp.float32),
        'class_w': jnp.ones((class_num,), jnp.float32).at[0].set(0.3),
        'class_w2': jnp.ones((class_num2,), jnp.float32).at[0].set(0.3),
    }


def prepare_params(raw):
    """One-time layout prep: transpose, lane-pad and bf16-cast kernel weights."""
    D = 10 * raw['hidden_size']
    C3 = raw['class_num']
    C2 = raw['class_num2']
    Dp = _round_up(D, 128)
    Cp = max(128, _round_up(C3 + C2, 128))

    wp = jnp.zeros((Dp, Dp), jnp.bfloat16)
    wp = wp.at[:D, :D].set(raw['pooler_w'].T.astype(jnp.bfloat16))
    bp = jnp.zeros((1, Dp), jnp.float32).at[0, :D].set(raw['pooler_b'])

    wcls = jnp.zeros((Dp, Cp), jnp.bfloat16)
    wcls = wcls.at[:D, :C3].set(raw['fc_w'].T.astype(jnp.bfloat16))
    wcls = wcls.at[:D, C3:C3 + C2].set(raw['fc2_w'].T.astype(jnp.bfloat16))
    bcls = jnp.zeros((1, Cp), jnp.float32)
    bcls = bcls.at[0, :C3].set(raw['fc_b']).at[0, C3:C3 + C2].set(raw['fc2_b'])

    params = dict(raw)
    params.update({
        'D_pad': Dp, 'C_pad': Cp,
        'wp_t_bf16': wp, 'bp_pad': bp,
        'wcls_t_bf16': wcls, 'bcls': bcls,
    })
    return params


# ----------------------------------------------------------------------------
# Pure-JAX reference for correctness check.
# Mirrors the kernel's declared mixed-precision policy (bf16 MXU inputs,
# f32 accumulation / activations) so the comparison checks the kernel, not the
# quantization choice.
# ----------------------------------------------------------------------------
def _reference(params, data):
    H = params['hidden_size']
    D = 10 * H
    x = data['last_hidden_state']
    B = x.shape[0]
    clses = x[:, :10, :].reshape(B, D)

    a = _elu(clses).astype(jnp.bfloat16)
    wp = params['pooler_w'].T.astype(jnp.bfloat16)
    h = _elu(jnp.dot(a, wp, preferred_element_type=jnp.float32) + params['pooler_b'])

    hb = h.astype(jnp.bfloat16)
    s3 = jnp.dot(hb, params['fc_w'].T.astype(jnp.bfloat16),
                 preferred_element_type=jnp.float32) + params['fc_b']
    s2 = jnp.dot(hb, params['fc2_w'].T.astype(jnp.bfloat16),
                 preferred_element_type=jnp.float32) + params['fc2_b']

    def wce(s, y, w):
        logp = jax.nn.log_softmax(s, axis=1)
        nll = -jnp.take_along_axis(logp, y[:, None], axis=1)[:, 0]
        wi = w[y]
        return jnp.sum(wi * nll) / jnp.sum(wi)

    ce = wce(s3, data['label'], params['class_w']) + \
         wce(s2, data['label2'], params['class_w2'])
    map2 = data['map'] @ params['fc2_w']
    lpara = 0.5 * jnp.sum((map2 - params['fc_w']) ** 2)
    sm3 = jax.nn.softmax(s3, axis=1)
    s23 = s2 @ data['map'].T
    lout = jnp.mean(jnp.maximum(sm3 - s23, 0.0))
    return ce + 1e-5 * lpara + 1e-5 * lout, s3


if __name__ == "__main__":
    key = jax.random.PRNGKey(0)
    B, S, H = 2, 16, 32          # small stand-in for (batch, seq, 768)
    C3, C2 = 8, 4                # class_num, class_num2
    kp, kx, km = jax.random.split(key, 3)

    raw = init_params(kp, hidden=H, class_num=C3, class_num2=C2)
    params = prepare_params(raw)

    # TODO(synk): pretrained HF BERT encoder ('hfl/chinese-roberta-wwm-ext') is
    # not translated; its last_hidden_state is supplied as a synthetic input.
    last_hidden = jax.random.normal(kx, (B, S, H), jnp.float32)

    data = {
        'last_hidden_state': last_hidden,
        'label': jnp.array([1, 3], jnp.int32),
        'label2': jnp.array([1, 2], jnp.int32),
        'map': 0.05 * jax.random.normal(km, (C3, C2), jnp.float32),
    }

    out = hierarchy_bert_forward(params, data, mode='train', acc_result=None)
    loss = jax.block_until_ready(out['loss'])
    s3 = jax.block_until_ready(out['score3'])

    ref_loss, ref_s3 = _reference(params, data)
    assert jnp.allclose(s3, ref_s3, rtol=2e-3, atol=2e-3), "score3 mismatch"
    assert jnp.allclose(loss, ref_loss, rtol=2e-3, atol=2e-3), "loss mismatch"

    print("KERNEL_OK")
</pallas_src>

<mosaic_0001>
module attributes {stable_mosaic.version = 11 : i64} {
  func.func @_pooler_kernel(%arg0: i32, %arg1: i32, %arg2: memref<8x128xf32, #tpu.memory_space<vmem>>, %arg3: memref<128x128xbf16, #tpu.memory_space<vmem>>, %arg4: memref<1x128xf32, #tpu.memory_space<vmem>>, %arg5: memref<8x128xf32, #tpu.memory_space<vmem>>, %arg6: memref<8x128xf32, #tpu.memory_space<vmem>>) attributes {dimension_semantics = [#tpu.dimension_semantics<parallel>, #tpu.dimension_semantics<arbitrary>], iteration_bounds = array<i64: 3, 3>, scalar_prefetch = 0 : i64, scratch_operands = 1 : i64, tpu.core_type = #tpu.core_type<tc>, window_params = [{transform_indices = @transform_0, window_bounds = array<i64: 8, 128>}, {transform_indices = @transform_1, window_bounds = array<i64: 128, 128>}, {transform_indices = @transform_2, window_bounds = array<i64: 1, 128>}, {transform_indices = @transform_3, window_bounds = array<i64: 8, 128>}]} {
    %c0_i32 = arith.constant 0 : i32
    %0 = arith.cmpi eq, %arg1, %c0_i32 : i32
    %1 = arith.extui %0 : i1 to i32
    %c0_i32_0 = arith.constant 0 : i32
    %2 = arith.cmpi ne, %1, %c0_i32_0 : i32
    scf.if %2 {
      %cst_12 = arith.constant 0.000000e+00 : f32
      %21 = vector.broadcast %cst_12 : f32 to vector<8x128xf32>
      %c0_13 = arith.constant 0 : index
      %c0_14 = arith.constant 0 : index
      %22 = vector.load %arg6[%c0_13, %c0_14] : memref<8x128xf32, #tpu.memory_space<vmem>>, vector<8x128xf32>
      tpu.vector_store %arg6[%c0_13, %c0_14], %21 {strides = array<i32>} : memref<8x128xf32, #tpu.memory_space<vmem>>, vector<8x128xf32>,
    } else {
    }
    %c0 = arith.constant 0 : index
    %c0_1 = arith.constant 0 : index
    %3 = vector.load %arg2[%c0, %c0_1] : memref<8x128xf32, #tpu.memory_space<vmem>>, vector<8x128xf32>
    %cst = arith.constant 0.000000e+00 : f32
    %4 = vector.broadcast %cst : f32 to vector<8x128xf32>
    %5 = arith.cmpf ogt, %3, %4 : vector<8x128xf32>
    %cst_2 = arith.constant 0.000000e+00 : f32
    %6 = vector.broadcast %cst_2 : f32 to vector<8x128xf32>
    %7 = arith.minimumf %3, %6 : vector<8x128xf32>
    %8 = math.exp %7 : vector<8x128xf32>
    %cst_3 = arith.constant 1.000000e+00 : f32
    %9 = vector.broadcast %cst_3 : f32 to vector<8x128xf32>
    %10 = arith.subf %8, %9 : vector<8x128xf32>
    %11 = arith.select %5, %3, %10 : vector<8x128xi1>, vector<8x128xf32>
    %12 = arith.truncf %11 : vector<8x128xf32> to vector<8x128xbf16>
    %c0_4 = arith.constant 0 : index
    %c0_5 = arith.constant 0 : index
    %13 = vector.load %arg6[%c0_4, %c0_5] : memref<8x128xf32, #tpu.memory_space<vmem>>, vector<8x128xf32>
    %c0_6 = arith.constant 0 : index
    %c0_7 = arith.constant 0 : index
    %14 = vector.load %arg3[%c0_6, %c0_7] : memref<128x128xbf16, #tpu.memory_space<vmem>>, vector<128x128xbf16>
    %cst_8 = arith.constant dense<0.000000e+00> : vector<8x128xf32>
    %15 = tpu.matmul %12, %14, %cst_8 {dimension_numbers = #tpu.dot_dimension_numbers<[1], [0], [0], [1], [0, 0, 1, 1], [], []>} : vector<8x128xbf16>, vector<128x128xbf16>, vector<8x128xf32> -> vector<8x128xf32>
    %16 = arith.addf %13, %15 : vector<8x128xf32>
    %c0_9 = arith.constant 0 : index
    %c0_10 = arith.constant 0 : index
    %17 = vector.load %arg6[%c0_9, %c0_10] : memref<8x128xf32, #tpu.memory_space<vmem>>, vector<8x128xf32>
    tpu.vector_store %arg6[%c0_9, %c0_10], %16 {strides = array<i32>} : memref<8x128xf32, #tpu.memory_space<vmem>>, vector<8x128xf32>,
    %c2_i32 = arith.constant 2 : i32
    %18 = arith.cmpi eq, %arg1, %c2_i32 : i32
    %19 = arith.extui %18 : i1 to i32
    %c0_i32_11 = arith.constant 0 : i32
    %20 = arith.cmpi ne, %19, %c0_i32_11 : i32
    scf.if %20 {
      %c0_12 = arith.constant 0 : index
      %c0_13 = arith.constant 0 : index
      %21 = vector.load %arg6[%c0_12, %c0_13] : memref<8x128xf32, #tpu.memory_space<vmem>>, vector<8x128xf32>
      %c0_14 = arith.constant 0 : index
      %c0_15 = arith.constant 0 : index
      %22 = vector.load %arg4[%c0_14, %c0_15] : memref<1x128xf32, #tpu.memory_space<vmem>>, vector<1x128xf32>
      %23 = vector.broadcast %22 : vector<1x128xf32> to vector<8x128xf32>
      %24 = arith.addf %21, %23 : vector<8x128xf32>
      %cst_16 = arith.constant 0.000000e+00 : f32
      %25 = vector.broadcast %cst_16 : f32 to vector<8x128xf32>
      %26 = arith.cmpf ogt, %24, %25 : vector<8x128xf32>
      %cst_17 = arith.constant 0.000000e+00 : f32
      %27 = vector.broadcast %cst_17 : f32 to vector<8x128xf32>
      %28 = arith.minimumf %24, %27 : vector<8x128xf32>
      %29 = math.exp %28 : vector<8x128xf32>
      %cst_18 = arith.constant 1.000000e+00 : f32
      %30 = vector.broadcast %cst_18 : f32 to vector<8x128xf32>
      %31 = arith.subf %29, %30 : vector<8x128xf32>
      %32 = arith.select %26, %24, %31 : vector<8x128xi1>, vector<8x128xf32>
      %c0_19 = arith.constant 0 : index
      %c0_20 = arith.constant 0 : index
      %33 = vector.load %arg5[%c0_19, %c0_20] : memref<8x128xf32, #tpu.memory_space<vmem>>, vector<8x128xf32>
      tpu.vector_store %arg5[%c0_19, %c0_20], %32 {strides = array<i32>} : memref<8x128xf32, #tpu.memory_space<vmem>>, vector<8x128xf32>,
    } else {
    }
    return
  }
  func.func @transform_0(%arg0: i32, %arg1: i32) -> (i32, i32) {
    %c0_i32 = arith.constant 0 : i32
    %c0_i32_0 = arith.constant 0 : i32
    return %c0_i32, %arg1 : i32, i32
  }
  func.func @transform_1(%arg0: i32, %arg1: i32) -> (i32, i32) {
    %c0_i32 = arith.constant 0 : i32
    return %arg1, %arg0 : i32, i32
  }
  func.func @transform_2(%arg0: i32, %arg1: i32) -> (i32, i32) {
    %c0_i32 = arith.constant 0 : i32
    %c0_i32_0 = arith.constant 0 : i32
    return %c0_i32, %arg0 : i32, i32
  }
  func.func @transform_3(%arg0: i32, %arg1: i32) -> (i32, i32) {
    %c0_i32 = arith.constant 0 : i32
    %c0_i32_0 = arith.constant 0 : i32
    return %c0_i32, %arg0 : i32, i32
  }
}

</mosaic_0001>

<llo_original>
// kernel: tpu_custom_call.1
$region0: #{tpu_custom_call.1}
  #allocation0 [shape = 'u32[]', space=smem, size = 0x4, offset = 0x4, fixed_abs, tag = 'smem constant byte address 0x4 - core index']
  #allocation1 [shape = 'u32[144,128]{1,0:T(1,128)}', space=vmem, size = 0x12000, scoped, tag = 'internal scratch']
  #allocation2 [shape = 'f32[8,128]{1,0:T(8,128)}', space=vmem, size = 0x1000, scoped, tag = 'scratch operand']
  %s0 = inlined_call_operand.hbm [shape: f32[8,384], index: 0, kind: input, shape index: {}]
  %s1 = inlined_call_operand.hbm [shape: bf16[384,384], index: 1, kind: input, shape index: {}]
  %s2 = inlined_call_operand.vmem [shape: f32[1,384], index: 2, kind: input, shape index: {}]
  %s3 = inlined_call_operand.hbm [shape: f32[8,384], index: 3, kind: output, shape index: {}]
  %s4 = sld [smem:[#allocation0]]
  $region61: #{tpu_custom_call.1} parent=0
    _
  %s6 = ssub.s32 1, %s4
  %s7 = scalar_select 0, %s6, %s4
  $region1: #{tpu_custom_call.1} parent=0
    #allocation3 [shape = 'u8[8192]{0}', space=vmem, size = 0x2000, scoped, tag = 'input window, operand 0']
    #allocation4 [shape = 's32[2]{0}', space=sflag, size = 0x8, scoped, tag = 'scoped memory for tpu_custom_call.1']
    #allocation5 [shape = 's32[2]{0}', space=sflag, size = 0x8, scoped, tag = 'scoped memory for tpu_custom_call.1']
    #allocation6 [shape = 'u8[65536]{0}', space=vmem, size = 0x10000, scoped, tag = 'input window, operand 1']
    #allocation7 [shape = 's32[2]{0}', space=sflag, size = 0x8, scoped, tag = 'scoped memory for tpu_custom_call.1']
    #allocation8 [shape = 'u8[8192]{0}', space=vmem, size = 0x2000, scoped, tag = 'output window, operand 0']
    %8 = vsyncpa [#allocation4], 0
    %s9 = scalar_lea.sflag [#allocation4], 1
    %10 = vsyncpa %s9, 0
    %11 = vsyncpa [#allocation7], 0
    %s12 = scalar_lea.sflag [#allocation7], 1
    %13 = vsyncpa %s12, 0
    %14 = vsyncpa [#allocation5], 0
    %s15 = scalar_lea.sflag [#allocation5], 1
    %16 = vsyncpa %s15, 0
    loop: start=0, step=1, limit=11
    $region2: #{tpu_custom_call.1} parent=1 // loop_pre_header
      _
    $region3: #{tpu_custom_call.1} parent=1 // loop_header
      %s18 = sphi 0, %s22
      %p19 = scmp.ge.s32.totalorder %s18, 11
      %s25 = sphi 0, %s37
      %s26 = sphi 0, %s33
      %s27 = sphi 0, %s25
      %s28 = sphi 0, %s26
      %s29 = sphi 0, %s27
      %s30 = sphi 0, %s28
      %s40 = sphi 0, %s42
      %s43 = sphi 0, %s40
      %s44 = sphi 0, %s43
      %s60 = sphi 0, %s44
      %s68 = sphi 0, %s70
      %s71 = sphi 0, %s68
      %s72 = sphi 0, %s71
      %s88 = sphi 0, %s72
      %s94 = sphi 0, %s96
      %s97 = sphi 0, %s94
      %s98 = sphi 0, %s97
      %s114 = sphi 0, %s98
      %s120 = sphi 0, %s122
      %s123 = sphi 0, %s120
      %s124 = sphi 0, %s123
      %s140 = sphi 0, %s124
    $region4: #{tpu_custom_call.1} parent=1 // loop_header_branch
      %21 = sbr.rel (%p19) target = $region8
    $region5: #{tpu_custom_call.1} parent=1 // loop_body
      %s23 = ssub.s32 %s18, 1
      %s24 = ssub.s32 %s18, 2
      %s31 = sadd.s32 1, %s26
      %p32 = scmp.ge.s32.totalorder %s31, 3
      %s33 = scalar_select %p32, 0, %s31
      %s34 = sadd.s32 1, %s25
      %s35 = scalar_select %p32, %s34, %s25
      %p36 = scmp.ge.s32.totalorder %s35, 3
      %s37 = scalar_select %p36, 0, %s35
      %s38 = ssub.s32 %s26, %s33
      %p39 = scmp.eq.s32.totalorder %s38, 0
      %s41 = sadd.s32 %s40, 1
      %s42 = scalar_select %p39, %s40, %s41
      %p45 = pneg %p39
      %p46 = scmp.eq.s32.totalorder %s18, 8
      %p47 = por %p45, %p46
      %p48 = scmp.ne.s32.totalorder %s40, %s43
      %p49 = scmp.eq.s32.totalorder %s18, 0
      %p50 = por %p48, %p49
      %p51 = scmp.ne.s32.totalorder %s40, %s43
      %p52 = scmp.eq.s32.totalorder %s23, 8
      %p53 = por %p51, %p52
      %p54 = scmp.ne.s32.totalorder %s43, %s44
      %p55 = scmp.eq.s32.totalorder %s23, 0
      %p56 = por %p54, %p55
      %p57 = scmp.ne.s32.totalorder %s43, %s44
      %p58 = scmp.eq.s32.totalorder %s24, 8
      %p59 = por %p57, %p58
      %p61 = scmp.ne.s32.totalorder %s44, %s60
      %p62 = scmp.eq.s32.totalorder %s24, 0
      %p63 = por %p61, %p62
      %s64 = ssub.s32 %s26, %s33
      %s65 = ssub.s32 %s25, %s37
      %s66 = sor.u32 %s64, %s65
      %p67 = scmp.eq.s32.totalorder %s66, 0
      %s69 = sadd.s32 %s68, 1
      %s70 = scalar_select %p67, %s68, %s69
      %p73 = pneg %p67
      %p74 = scmp.eq.s32.totalorder %s18, 8
      %p75 = por %p73, %p74
      %p76 = scmp.ne.s32.totalorder %s68, %s71
      %p77 = scmp.eq.s32.totalorder %s18, 0
      %p78 = por %p76, %p77
      %p79 = scmp.ne.s32.totalorder %s68, %s71
      %p80 = scmp.eq.s32.totalorder %s23, 8
      %p81 = por %p79, %p80
      %p82 = scmp.ne.s32.totalorder %s71, %s72
      %p83 = scmp.eq.s32.totalorder %s23, 0
      %p84 = por %p82, %p83
      %p85 = scmp.ne.s32.totalorder %s71, %s72
      %p86 = scmp.eq.s32.totalorder %s24, 8
      %p87 = por %p85, %p86
      %p89 = scmp.ne.s32.totalorder %s72, %s88
      %p90 = scmp.eq.s32.totalorder %s24, 0
      %p91 = por %p89, %p90
      %s92 = ssub.s32 %s25, %s37
      %p93 = scmp.eq.s32.totalorder %s92, 0
      %s95 = sadd.s32 %s94, 1
      %s96 = scalar_select %p93, %s94, %s95
      %p99 = pneg %p93
      %p100 = scmp.eq.s32.totalorder %s18, 8
      %p101 = por %p99, %p100
      %p102 = scmp.ne.s32.totalorder %s94, %s97
      %p103 = scmp.eq.s32.totalorder %s18, 0
      %p104 = por %p102, %p103
      %p105 = scmp.ne.s32.totalorder %s94, %s97
      %p106 = scmp.eq.s32.totalorder %s23, 8
      %p107 = por %p105, %p106
      %p108 = scmp.ne.s32.totalorder %s97, %s98
      %p109 = scmp.eq.s32.totalorder %s23, 0
      %p110 = por %p108, %p109
      %p111 = scmp.ne.s32.totalorder %s97, %s98
      %p112 = scmp.eq.s32.totalorder %s24, 8
      %p113 = por %p111, %p112
      %p115 = scmp.ne.s32.totalorder %s98, %s114
      %p116 = scmp.eq.s32.totalorder %s24, 0
      %p117 = por %p115, %p116
      %s118 = ssub.s32 %s25, %s37
      %p119 = scmp.eq.s32.totalorder %s118, 0
      %s121 = sadd.s32 %s120, 1
      %s122 = scalar_select %p119, %s120, %s121
      %p125 = pneg %p119
      %p126 = scmp.eq.s32.totalorder %s18, 8
      %p127 = por %p125, %p126
      %p128 = scmp.ne.s32.totalorder %s120, %s123
      %p129 = scmp.eq.s32.totalorder %s18, 0
      %p130 = por %p128, %p129
      %p131 = scmp.ne.s32.totalorder %s120, %s123
      %p132 = scmp.eq.s32.totalorder %s23, 8
      %p133 = por %p131, %p132
      %p134 = scmp.ne.s32.totalorder %s123, %s124
      %p135 = scmp.eq.s32.totalorder %s23, 0
      %p136 = por %p134, %p135
      %p137 = scmp.ne.s32.totalorder %s123, %s124
      %p138 = scmp.eq.s32.totalorder %s24, 8
      %p139 = por %p137, %p138
      %p141 = scmp.ne.s32.totalorder %s124, %s140
      %p142 = scmp.eq.s32.totalorder %s24, 0
      %p143 = por %p141, %p142
      %p144 = scmp.le.s32.totalorder 1, %s18
      %p145 = scmp.lt.s32.totalorder %s18, 10
      %p146 = pnand %p144, %p145
      %p147 = pneg %p146
      // Predicated region
      $region9: #{tpu_custom_call.1} parent=5 // pred_check
        _
      $region10: #{tpu_custom_call.1} parent=5 // pred_check_branch
        %149 = sbr.rel (%p146) target = $region12
      $region11: #{tpu_custom_call.1} parent=5 // pred_region
        %s150 = ssub.s32 %s18, 1
      $region12: #{tpu_custom_call.1} parent=5 // pred_fallthru
        _
      %p151 = scmp.lt.s32.totalorder %s18, 9
      // Predicated region
      $region13: #{tpu_custom_call.1} parent=5 // pred_check
        %p152 = pneg %p151
      $region14: #{tpu_custom_call.1} parent=5 // pred_check_branch
        %154 = sbr.rel (%p152) target = $region16
      $region15: #{tpu_custom_call.1} parent=5 // pred_region
        // Predicated region
        $region17: #{tpu_custom_call.1} parent=15 // pred_check
          %p155 = pneg %p50
        $region18: #{tpu_custom_call.1} parent=15 // pred_check_branch
          %157 = sbr.rel (%p155) target = $region20
        $region19: #{tpu_custom_call.1} parent=15 // pred_region
          %s158 = sand.u32 %s40, 1
          %s159 = scalar_lea.sflag [#allocation4], %s158
          %s160 = sand.u32 %s40, 1
          %s161 = smul.addr %s160, 8
          %s162 = scalar_lea.vmem [#allocation3], %s161
          %s164 = ssub.s32 128, 128
          %165 = vsyncadd %s159, %s164
          %s166 = smul.addr %s26, 128
          %s167 = scalar_lea.hbm %s0, %s166
          %s169 = sshll.u32 %s162, 4
          %s170 = int_to_ptr.vmem [resolvable:$true] %s169
          %172 = dma.hbm_to_vmem [thread:$0]  %s167, 128, %s170, %s159
        $region20: #{tpu_custom_call.1} parent=15 // pred_fallthru
          _
        // Predicated region
        $region21: #{tpu_custom_call.1} parent=15 // pred_check
          %p173 = pneg %p78
        $region22: #{tpu_custom_call.1} parent=15 // pred_check_branch
          %175 = sbr.rel (%p173) target = $region24
        $region23: #{tpu_custom_call.1} parent=15 // pred_region
          %s176 = sand.u32 %s68, 1
          %s177 = scalar_lea.sflag [#allocation7], %s176
          %s178 = sand.u32 %s68, 1
          %s179 = smul.addr %s178, 64
          %s180 = scalar_lea.vmem [#allocation6], %s179
          %s181 = smul.u32 16, %s26
          %s183 = ssub.s32 1024, 1024
          %184 = vsyncadd %s177, %s183
          %s185 = smul.addr %s181, 3
          %s186 = sadd.s32 %s25, %s185
          %s187 = smul.addr %s186, 64
          %s188 = scalar_lea.hbm %s1, %s187
          %s189 = sshll.u32 %s180, 4
          %s190 = int_to_ptr.vmem [resolvable:$true] %s189
          %195 = dma.hbm_to_vmem [thread:$0]  %s188, 1024, %s190, %s177, 192, 64, 4
        $region24: #{tpu_custom_call.1} parent=15 // pred_fallthru
          _
        // Predicated region
        $region25: #{tpu_custom_call.1} parent=15 // pred_check
          %p196 = pneg %p104
        $region26: #{tpu_custom_call.1} parent=15 // pred_check_branch
          %198 = sbr.rel (%p196) target = $region28
        $region27: #{tpu_custom_call.1} parent=15 // pred_region
          %p199 = scmp.lt.s32.totalorder %s25, 2
          %s200 = scalar_select %p199, %s25, 2
          %s201 = scalar_lea.vmem %s2, %s200
        $region28: #{tpu_custom_call.1} parent=15 // pred_fallthru
          _
      $region16: #{tpu_custom_call.1} parent=5 // pred_fallthru
        _
      %p202 = scmp.le.s32.totalorder 1, %s18
      %p203 = scmp.lt.s32.totalorder %s18, 10
      %p204 = pnand %p202, %p203
      %p205 = pneg %p204
      // Predicated region
      $region29: #{tpu_custom_call.1} parent=5 // pred_check
        _
      $region30: #{tpu_custom_call.1} parent=5 // pred_check_branch
        %207 = sbr.rel (%p204) target = $region32
      $region31: #{tpu_custom_call.1} parent=5 // pred_region
        %s208 = ssub.s32 %s18, 1
        %s209 = sand.u32 %s43, 1
        %s210 = scalar_lea.sflag [#allocation4], %s209
        %s211 = sand.u32 %s43, 1
        %s212 = smul.addr %s211, 8
        %s213 = scalar_lea.vmem [#allocation3], %s212
        // Predicated region
        $region33: #{tpu_custom_call.1} parent=31 // pred_check
          %p214 = pneg %p56
        $region34: #{tpu_custom_call.1} parent=31 // pred_check_branch
          %216 = sbr.rel (%p214) target = $region36
        $region35: #{tpu_custom_call.1} parent=31 // pred_region
          %217 = dma.done %s210, 128
        $region36: #{tpu_custom_call.1} parent=31 // pred_fallthru
          _
        %s218 = sand.u32 %s71, 1
        %s219 = scalar_lea.sflag [#allocation7], %s218
        %s220 = sand.u32 %s71, 1
        %s221 = smul.addr %s220, 64
        %s222 = scalar_lea.vmem [#allocation6], %s221
        // Predicated region
        $region37: #{tpu_custom_call.1} parent=31 // pred_check
          %p223 = pneg %p84
        $region38: #{tpu_custom_call.1} parent=31 // pred_check_branch
          %225 = sbr.rel (%p223) target = $region40
        $region39: #{tpu_custom_call.1} parent=31 // pred_region
          %226 = dma.done %s219, 1024
        $region40: #{tpu_custom_call.1} parent=31 // pred_fallthru
          _
        %s227 = sand.u32 %s43, 1
        %s228 = scalar_lea.sflag [#allocation4], %s227
        %s229 = sand.u32 %s43, 1
        %s230 = smul.addr %s229, 8
        %s231 = scalar_lea.vmem [#allocation3], %s230
        %p232 = pneg %p56
        %p233 = pneg %p53
        %s234 = sand.u32 %s71, 1
        %s235 = scalar_lea.sflag [#allocation7], %s234
        %s236 = sand.u32 %s71, 1
        %s237 = smul.addr %s236, 64
        %s238 = scalar_lea.vmem [#allocation6], %s237
        %p239 = pneg %p84
        %p240 = pneg %p81
        %p241 = scmp.lt.s32.totalorder %s27, 2
        %s242 = scalar_select %p241, %s27, 2
        %s243 = scalar_lea.vmem %s2, %s242
        %p244 = pneg %p110
        %p245 = pneg %p107
        %p246 = pneg %p136
        %p247 = pneg %p133
        %s248 = sand.u32 %s123, 1
        %s249 = scalar_lea.sflag [#allocation5], %s248
        %s250 = sand.u32 %s123, 1
        %s251 = smul.addr %s250, 8
        %s252 = scalar_lea.vmem [#allocation8], %s251
        %s253 = smul.u32 16, %s28
        %p254 = scmp.lt.s32.totalorder %s27, 2
        %s255 = scalar_select %p254, %s27, 2
        %s256 = scalar_lea.vmem %s2, %s255
        %p258 = scmp.eq.s32.totalorder %s28, 0
        // Predicated region
        $region41: #{tpu_custom_call.1} parent=31 // pred_check
          %p259 = pneg %p258
        $region42: #{tpu_custom_call.1} parent=31 // pred_check_branch
          %261 = sbr.rel (%p259) target = $region44
        $region43: #{tpu_custom_call.1} parent=31 // pred_region
          %262 = vst [vmem:[#allocation2] sm:$0xff] 0.0
        $region44: #{tpu_custom_call.1} parent=31 // pred_fallthru
          _
        %v263 = vld [vmem:[%s213] sm:$0xff]
        %vm264 = vcmp.gt.f32.partialorder %v263, 0.0
        %v265 = vmin.f32 %v263, 0.0
        %v266 = vmul.f32 %v265, 1.442695
        %v267 = vpow.pop %v266
        %v268 = vsub.f32 %v267, 1.0
        %v269 = vsel %vm264, %v263, %v268
        %v270 = vpack.c.bf16 %v269, %v269
        %v271 = vld [vmem:[#allocation2] sm:$0xff]
        %v272 = vld [vmem:[%s222] sm:$0xf]
        %v273 = vld [vmem:[%s222 + $0x4] sm:$0xf]
        %v274 = vld [vmem:[%s222 + $0x8] sm:$0xf]
        %v275 = vld [vmem:[%s222 + $0xc] sm:$0xf]
        %v276 = vld [vmem:[%s222 + $0x10] sm:$0xf]
        %v277 = vld [vmem:[%s222 + $0x14] sm:$0xf]
        %v278 = vld [vmem:[%s222 + $0x18] sm:$0xf]
        %v279 = vld [vmem:[%s222 + $0x1c] sm:$0xf]
        %v280 = vld [vmem:[%s222 + $0x20] sm:$0xf]
        %v281 = vld [vmem:[%s222 + $0x24] sm:$0xf]
        %v282 = vld [vmem:[%s222 + $0x28] sm:$0xf]
        %v283 = vld [vmem:[%s222 + $0x2c] sm:$0xf]
        %v284 = vld [vmem:[%s222 + $0x30] sm:$0xf]
        %v285 = vld [vmem:[%s222 + $0x34] sm:$0xf]
        %v286 = vld [vmem:[%s222 + $0x38] sm:$0xf]
        %v287 = vld [vmem:[%s222 + $0x3c] sm:$0xf]
        %v304 = vunpack.c.l.b16 %v272
        %v305 = vunpack.c.l.b16 %v273
        %v306 = vunpack.c.l.b16 %v274
        %v307 = vunpack.c.l.b16 %v275
        %v308 = vunpack.c.l.b16 %v276
        %v309 = vunpack.c.l.b16 %v277
        %v310 = vunpack.c.l.b16 %v278
        %v311 = vunpack.c.l.b16 %v279
        %v312 = vunpack.c.l.b16 %v280
        %v313 = vunpack.c.l.b16 %v281
        %v314 = vunpack.c.l.b16 %v282
        %v315 = vunpack.c.l.b16 %v283
        %v316 = vunpack.c.l.b16 %v284
        %v317 = vunpack.c.l.b16 %v285
        %v318 = vunpack.c.l.b16 %v286
        %v319 = vunpack.c.l.b16 %v287
        %v320 = vpack.c.b16 %v305, %v304
        %v321 = vpack.c.b16 %v307, %v306
        %v322 = vpack.c.b16 %v309, %v308
        %v323 = vpack.c.b16 %v311, %v310
        %v324 = vpack.c.b16 %v313, %v312
        %v325 = vpack.c.b16 %v315, %v314
        %v326 = vpack.c.b16 %v317, %v316
        %v327 = vpack.c.b16 %v319, %v318
        %336 = vmatprep.subr.bf16.mxu0 0
        %337 = vmatpush1.bf16.msra.mxu0 %v320
        %338 = vmatprep.subr.bf16.mxu0 0
        %339 = vmatpush1.bf16.msra.mxu0 %v321
        %340 = vmatprep.subr.bf16.mxu0 0
        %341 = vmatpush1.bf16.msra.mxu0 %v322
        %342 = vmatprep.subr.bf16.mxu0 0
        %343 = vmatpush1.bf16.msra.mxu0 %v323
        %344 = vmatprep.subr.bf16.mxu0 0
        %345 = vmatpush1.bf16.msra.mxu0 %v324
        %346 = vmatprep.subr.bf16.mxu0 0
        %347 = vmatpush1.bf16.msra.mxu0 %v325
        %348 = vmatprep.subr.bf16.mxu0 0
        %349 = vmatpush1.bf16.msra.mxu0 %v326
        %350 = vmatprep.subr.bf16.mxu0 0
        %351 = vmatpush1.bf16.msra.mxu0 %v327
        %352 = vmatprep.subr.bf16.mxu0 0
        %353 = vmatpush1.bf16.msra.mxu0 0
        %354 = vmatprep.subr.bf16.mxu0 0
        %355 = vmatpush1.bf16.msra.mxu0 0
        %356 = vmatprep.subr.bf16.mxu0 0
        %357 = vmatpush1.bf16.msra.mxu0 0
        %358 = vmatprep.subr.bf16.mxu0 0
        %359 = vmatpush1.bf16.msra.mxu0 0
        %360 = vmatprep.subr.bf16.mxu0 0
        %361 = vmatpush1.bf16.msra.mxu0 0
        %362 = vmatprep.subr.bf16.mxu0 0
        %363 = vmatpush1.bf16.msra.mxu0 0
        %364 = vmatprep.subr.bf16.mxu0 0
        %365 = vmatpush1.bf16.msra.mxu0 0
        %366 = vmatprep.subr.bf16.mxu0 0
        %367 = vmatpush1.bf16.msra.mxu0 0
        %368 = vmatprep.mubr.bf16.mxu0 0
        %369 = vmatmul.mubr.bf16.gmra.mrb[0].mxu0 %v270
        %v370 = vpop.f32.mrb[0].mxu0
        %v371 = vadd.f32 0.0, %v370
        %v372 = vpop.f32.mrb[0].mxu0
        %v373 = vpop.f32.mrb[0].mxu0
        %v374 = vpop.f32.mrb[0].mxu0
        %375 = vdwg.mxu0
        %v376 = vadd.f32 %v271, %v371
        %377 = vst [vmem:[#allocation2] sm:$0xff] %v376
        %p378 = scmp.eq.s32.totalorder %s28, 2
        // Predicated region
        $region45: #{tpu_custom_call.1} parent=31 // pred_check
          %p379 = pneg %p378
        $region46: #{tpu_custom_call.1} parent=31 // pred_check_branch
          %381 = sbr.rel (%p379) target = $region48
        $region47: #{tpu_custom_call.1} parent=31 // pred_region
          %v382 = vld [vmem:[#allocation2] sm:$0xff]
          %v383 = vld [vmem:[%s256] sm:$0x1]
          %v385 = vlaneseq
          %v386 = vshrl.u32 %v385, 7
          %v387 = vsub.s32 0, %v386
          %v388 = vrot.slane %v383, %v387
          %v390 = vadd.f32 %v382, %v388
          %vm391 = vcmp.gt.f32.partialorder %v390, 0.0
          %v392 = vmin.f32 %v390, 0.0
          %v393 = vmul.f32 %v392, 1.442695
          %v394 = vpow.pop %v393
          %v395 = vsub.f32 %v394, 1.0
          %v396 = vsel %vm391, %v390, %v395
          %397 = vst [vmem:[%s252] sm:$0xff] %v396
        $region48: #{tpu_custom_call.1} parent=31 // pred_fallthru
          _
        %s398 = sand.u32 %s123, 1
        %s399 = scalar_lea.sflag [#allocation5], %s398
        %s400 = sand.u32 %s123, 1
        %s401 = smul.addr %s400, 8
        %s402 = scalar_lea.vmem [#allocation8], %s401
        // Predicated region
        $region49: #{tpu_custom_call.1} parent=31 // pred_check
          %p403 = pneg %p133
        $region50: #{tpu_custom_call.1} parent=31 // pred_check_branch
          %405 = sbr.rel (%p403) target = $region52
        $region51: #{tpu_custom_call.1} parent=31 // pred_region
          %s407 = ssub.s32 128, 128
          %408 = vsyncadd %s399, %s407
          %s409 = smul.addr %s27, 128
          %s410 = scalar_lea.hbm %s3, %s409
          %s412 = sshll.u32 %s402, 4
          %s413 = int_to_ptr.vmem [resolvable:$true] %s412
          %415 = dma.vmem_to_hbm [thread:$0]  %s413, 128, %s410, %s399
        $region52: #{tpu_custom_call.1} parent=31 // pred_fallthru
          _
      $region32: #{tpu_custom_call.1} parent=5 // pred_fallthru
        _
      %p416 = scmp.le.s32.totalorder 2, %s18
      // Predicated region
      $region53: #{tpu_custom_call.1} parent=5 // pred_check
        %p417 = pneg %p416
      $region54: #{tpu_custom_call.1} parent=5 // pred_check_branch
        %419 = sbr.rel (%p417) target = $region56
      $region55: #{tpu_custom_call.1} parent=5 // pred_region
        %s420 = ssub.s32 %s18, 2
        // Predicated region
        $region57: #{tpu_custom_call.1} parent=55 // pred_check
          %p421 = pneg %p139
        $region58: #{tpu_custom_call.1} parent=55 // pred_check_branch
          %423 = sbr.rel (%p421) target = $region60
        $region59: #{tpu_custom_call.1} parent=55 // pred_region
          %s424 = sand.u32 %s124, 1
          %s425 = scalar_lea.sflag [#allocation5], %s424
          %s426 = sand.u32 %s124, 1
          %s427 = smul.addr %s426, 8
          %s428 = scalar_lea.vmem [#allocation8], %s427
          %429 = dma.done %s425, 128
        $region60: #{tpu_custom_call.1} parent=55 // pred_fallthru
          _
      $region56: #{tpu_custom_call.1} parent=5 // pred_fallthru
        _
    $region6: #{tpu_custom_call.1} parent=1 // loop_footer
      %s22 = sadd.s32 1, %s18
    $region7: #{tpu_custom_call.1} parent=1 // loop_footer_branch
      %17 = sbr.rel target = $region3
    $region8: #{tpu_custom_call.1} parent=1 // loop_exit
      _
    %430 = vsyncpa [#allocation4], 1
    %s431 = scalar_lea.sflag [#allocation4], 1
    %432 = vsyncpa %s431, 1
    %433 = vsyncpa [#allocation7], 1
    %s434 = scalar_lea.sflag [#allocation7], 1
    %435 = vsyncpa %s434, 1
    %436 = vsyncpa [#allocation5], 1
    %s437 = scalar_lea.sflag [#allocation5], 1
    %438 = vsyncpa %s437, 1

</llo_original>
